<compile_context>
chip_gen: v7x
topology: tpu7x:2x2x1
jax: 0.10.0
libtpu: 0.0.40
codegen_flags: <defaults>
</compile_context>

<pallas_src>
import math

import jax
import jax.numpy as jnp
from jax.experimental import pallas as pl
from jax.experimental.pallas import tpu as pltpu


def _round_up(n: int, m: int) -> int:
    return ((n + m - 1) // m) * m


def _round_down(n: int, m: int) -> int:
    return (n // m) * m


# --------------------------------------------------------------------------- #
# Kernel
# --------------------------------------------------------------------------- #
def _mlp_kernel(x_ref, gate_ref, up_ref, down_ref, o_ref, acc_ref):
    # x_ref:    (tm, Hp)   activation tile (constant across j, bf16)
    # gate_ref: (Hp, ti)   gate_proj weight tile (bf16)
    # up_ref:   (Hp, ti)   up_proj weight tile (bf16)
    # down_ref: (ti, Hp)   down_proj weight tile (bf16)
    # o_ref:    (tm, Hp)   output tile (resident across j)
    # acc_ref:  (tm, Hp)   f32 accumulator scratch
    j = pl.program_id(1)
    nj = pl.num_programs(1)

    x = x_ref[...]
    gate = jnp.dot(x, gate_ref[...], preferred_element_type=jnp.float32)
    up = jnp.dot(x, up_ref[...], preferred_element_type=jnp.float32)

    # SiLU(gate) * up in f32 (VPU/EUP; hidden under the MXU work).
    hidden = (gate * jax.nn.sigmoid(gate)) * up

    # Partial down-projection for this I-tile, accumulated in f32.
    partial = jnp.dot(hidden.astype(down_ref.dtype), down_ref[...],
                      preferred_element_type=jnp.float32)

    @pl.when(j == 0)
    def _():
        acc_ref[...] = partial          # write-on-first-step (no zero fill)

    @pl.when(j > 0)
    def _():
        acc_ref[...] += partial

    @pl.when(j == nj - 1)
    def _():
        o_ref[...] = acc_ref[...].astype(o_ref.dtype)


# --------------------------------------------------------------------------- #
# One-time weight preparation (do this at weight-load time, not per forward)
# --------------------------------------------------------------------------- #
def prepare_idefics_mlp_weights(gate_w, up_w, down_w, *,
                                compute_dtype=jnp.bfloat16):
    """Pad weight matrices to lane multiples (128) and cast to the MXU compute
    dtype.  Call ONCE at load time; the returned arrays are streamed as-is by
    every forward (no per-call weight copies)."""
    H, I = gate_w.shape
    Hp = _round_up(H, 128)
    Ip = _round_up(I, 128)

    def prep(w, rp, cp):
        if w.shape != (rp, cp):
            w = jnp.pad(w, ((0, rp - w.shape[0]), (0, cp - w.shape[1])))
        return w.astype(compute_dtype)

    return prep(gate_w, Hp, Ip), prep(up_w, Hp, Ip), prep(down_w, Ip, Hp)


# --------------------------------------------------------------------------- #
# Tile selection (per device generation, from queried VMEM capacity)
# --------------------------------------------------------------------------- #
def _vmem_capacity_bytes() -> int:
    try:
        return int(pltpu.get_tpu_info().vmem_capacity_bytes)
    except Exception:
        return 64 << 20          # conservative (v7x) fallback


def _select_tiles(M, Hp, Ip, in_bytes, out_bytes, w_bytes, vmem_budget):
    """Pick (tm, ti).  Arithmetic intensity of this tiling is ~tm flops per
    weight byte, so we maximize tm and keep ti small (128-256)."""
    best = None
    for ti in (256, 128):
        ti = min(ti, Ip)
        # Double-buffered weight tiles: gate + up + down.
        w_tot = 2 * (Hp * ti + Hp * ti + ti * Hp) * w_bytes
        # Per-row-of-M bytes: x tile + out tile (double-buffered) + f32 acc.
        per_tm = 2 * Hp * in_bytes + 2 * Hp * out_bytes + Hp * 4
        tm_max = (vmem_budget - w_tot) // per_tm
        if tm_max < 8:
            continue
        tm = int(min(tm_max, 1024))
        # MXU-friendly granularity.
        tm = _round_down(tm, 128) if tm >= 256 else _round_down(tm, 8)
        # Never tile past the problem size; keep >=2 M tiles so the M axis
        # can split across the two TensorCores / megacore when M is large.
        tm = min(tm, _round_up(M, 8))
        if M >= 512:
            tm = min(tm, _round_up((M + 1) // 2, 128))
        tm = max(tm, 8)
        if best is None or tm > best[0] or (tm == best[0] and ti > best[1]):
            best = (tm, ti)
    if best is None:
        best = (8, 128)
    return best


# --------------------------------------------------------------------------- #
# Forward
# --------------------------------------------------------------------------- #
def idefics_mlp(x, gate_w, up_w, down_w, *, tm=None, ti=None,
                compute_dtype=jnp.bfloat16):
    """x: [batch, seq, hidden].
    gate_w/up_w: [hidden, inter], down_w: [inter, hidden] (or the padded/cast
    versions returned by prepare_idefics_mlp_weights)."""
    B, S, H = x.shape
    M = B * S
    Hp = _round_up(H, 128)

    # Prepare weights if the caller handed us raw (unpadded / non-bf16) ones.
    # In production call prepare_idefics_mlp_weights ONCE at load time so this
    # branch (a full weight copy) never runs per forward.
    if gate_w.shape[0] != Hp or gate_w.dtype != compute_dtype:
        gate_w, up_w, down_w = prepare_idefics_mlp_weights(
            gate_w, up_w, down_w, compute_dtype=compute_dtype)
    Hp, Ip = gate_w.shape

    in_bytes = jnp.dtype(compute_dtype).itemsize
    out_bytes = jnp.dtype(x.dtype).itemsize
    w_bytes = jnp.dtype(gate_w.dtype).itemsize

    vmem_cap = _vmem_capacity_bytes()
    vmem_budget = max(vmem_cap - (8 << 20), 16 << 20)

    auto_tm, auto_ti = _select_tiles(M, Hp, Ip, in_bytes, out_bytes, w_bytes,
                                     vmem_budget)
    tm = auto_tm if tm is None else max(8, _round_up(tm, 8))
    ti = auto_ti if ti is None else max(128, _round_up(ti, 128))
    ti = min(ti, Ip)
    if Ip % ti != 0:                    # ti must divide the padded inter dim
        ti = math.gcd(ti, Ip)           # both multiples of 128 -> ti >= 128

    Mp = _round_up(M, tm)
    nj = Ip // ti

    # Pad + cast activations (cheap relative to the streamed weights).
    x2d = jnp.pad(x.reshape(M, H), ((0, Mp - M), (0, Hp - H)))
    x2d = x2d.astype(compute_dtype)

    # VMEM accounting for the chosen tiles, clamped to device capacity.
    vmem_need = (
        2 * tm * Hp * in_bytes          # x tiles (double-buffered)
        + 2 * Hp * ti * w_bytes         # gate tiles
        + 2 * Hp * ti * w_bytes         # up tiles
        + 2 * ti * Hp * w_bytes         # down tiles
        + 2 * tm * Hp * out_bytes       # output tiles
        + tm * Hp * 4                   # f32 accumulator scratch
    )
    vmem_limit = int(min(vmem_need + (4 << 20), vmem_cap))

    out2d = pl.pallas_call(
        _mlp_kernel,
        out_shape=jax.ShapeDtypeStruct((Mp, Hp), x.dtype),
        grid_spec=pltpu.PrefetchScalarGridSpec(
            num_scalar_prefetch=0,
            grid=(Mp // tm, nj),
            in_specs=[
                pl.BlockSpec((tm, Hp), lambda i, j: (i, 0)),   # x tile
                pl.BlockSpec((Hp, ti), lambda i, j: (0, j)),   # gate_proj tile
                pl.BlockSpec((Hp, ti), lambda i, j: (0, j)),   # up_proj tile
                pl.BlockSpec((ti, Hp), lambda i, j: (j, 0)),   # down_proj tile
            ],
            out_specs=pl.BlockSpec((tm, Hp), lambda i, j: (i, 0)),
            scratch_shapes=[pltpu.VMEM((tm, Hp), jnp.float32)],
        ),
        compiler_params=pltpu.CompilerParams(
            dimension_semantics=("parallel", "arbitrary"),
            vmem_limit_bytes=vmem_limit,
        ),
    )(x2d, gate_w, up_w, down_w)

    return out2d[:M, :H].reshape(B, S, H)


# --------------------------------------------------------------------------- #
# Reference + test
# --------------------------------------------------------------------------- #
def _reference_mlp(x, gate_w, up_w, down_w):
    g = x @ gate_w
    u = x @ up_w
    h = (g * jax.nn.sigmoid(g)) * u
    return h @ down_w


if __name__ == "__main__":
    # Small but tile-friendly shapes (H, I multiples of 128).
    batch, seq, hidden, inter = 2, 8, 256, 512

    key = jax.random.PRNGKey(0)
    kx, kg, ku, kd = jax.random.split(key, 4)

    x = jax.random.normal(kx, (batch, seq, hidden), dtype=jnp.float32)
    # nn.Linear weights stored transposed as [in_features, out_features].
    gate_w = (jax.random.normal(kg, (hidden, inter), dtype=jnp.float32)
              * (1.0 / hidden ** 0.5))
    up_w = (jax.random.normal(ku, (hidden, inter), dtype=jnp.float32)
            * (1.0 / hidden ** 0.5))
    down_w = (jax.random.normal(kd, (inter, hidden), dtype=jnp.float32)
              * (1.0 / inter ** 0.5))

    # One-time weight preparation (pad + cast to bf16) at "load time".
    gate_p, up_p, down_p = prepare_idefics_mlp_weights(gate_w, up_w, down_w)

    out = idefics_mlp(x, gate_p, up_p, down_p)
    out = jax.block_until_ready(out)

    ref = _reference_mlp(x, gate_w, up_w, down_w)
    assert out.shape == (batch, seq, hidden)
    # bf16 MXU operands with f32 accumulation vs an f32 reference.
    assert jnp.allclose(out, ref, atol=5e-2, rtol=5e-2), "mismatch vs reference"

    print("KERNEL_OK")
</pallas_src>

<mosaic_0001>
module attributes {stable_mosaic.version = 11 : i64} {
  func.func @_mlp_kernel(%arg0: i32, %arg1: i32, %arg2: memref<16x256xbf16, #tpu.memory_space<vmem>>, %arg3: memref<256x256xbf16, #tpu.memory_space<vmem>>, %arg4: memref<256x256xbf16, #tpu.memory_space<vmem>>, %arg5: memref<256x256xbf16, #tpu.memory_space<vmem>>, %arg6: memref<16x256xf32, #tpu.memory_space<vmem>>, %arg7: memref<16x256xf32, #tpu.memory_space<vmem>>) attributes {dimension_semantics = [#tpu.dimension_semantics<parallel>, #tpu.dimension_semantics<arbitrary>], iteration_bounds = array<i64: 1, 2>, scalar_prefetch = 0 : i64, scratch_operands = 1 : i64, tpu.core_type = #tpu.core_type<tc>, window_params = [{transform_indices = @transform_0, window_bounds = array<i64: 16, 256>}, {transform_indices = @transform_1, window_bounds = array<i64: 256, 256>}, {transform_indices = @transform_2, window_bounds = array<i64: 256, 256>}, {transform_indices = @transform_3, window_bounds = array<i64: 256, 256>}, {transform_indices = @transform_4, window_bounds = array<i64: 16, 256>}]} {
    %c0 = arith.constant 0 : index
    %c0_0 = arith.constant 0 : index
    %0 = vector.load %arg2[%c0, %c0_0] : memref<16x256xbf16, #tpu.memory_space<vmem>>, vector<16x256xbf16>
    %c0_1 = arith.constant 0 : index
    %c0_2 = arith.constant 0 : index
    %1 = vector.load %arg3[%c0_1, %c0_2] : memref<256x256xbf16, #tpu.memory_space<vmem>>, vector<256x256xbf16>
    %cst = arith.constant dense<0.000000e+00> : vector<16x256xf32>
    %2 = tpu.matmul %0, %1, %cst {dimension_numbers = #tpu.dot_dimension_numbers<[1], [0], [0], [1], [0, 0, 1, 1], [], []>} : vector<16x256xbf16>, vector<256x256xbf16>, vector<16x256xf32> -> vector<16x256xf32>
    %c0_3 = arith.constant 0 : index
    %c0_4 = arith.constant 0 : index
    %3 = vector.load %arg4[%c0_3, %c0_4] : memref<256x256xbf16, #tpu.memory_space<vmem>>, vector<256x256xbf16>
    %cst_5 = arith.constant dense<0.000000e+00> : vector<16x256xf32>
    %4 = tpu.matmul %0, %3, %cst_5 {dimension_numbers = #tpu.dot_dimension_numbers<[1], [0], [0], [1], [0, 0, 1, 1], [], []>} : vector<16x256xbf16>, vector<256x256xbf16>, vector<16x256xf32> -> vector<16x256xf32>
    %5 = arith.negf %2 : vector<16x256xf32>
    %6 = math.exp %5 : vector<16x256xf32>
    %cst_6 = arith.constant 1.000000e+00 : f32
    %7 = vector.broadcast %cst_6 : f32 to vector<16x256xf32>
    %8 = arith.addf %7, %6 : vector<16x256xf32>
    %9 = arith.divf %7, %8 : vector<16x256xf32>
    %10 = arith.mulf %2, %9 : vector<16x256xf32>
    %11 = arith.mulf %10, %4 : vector<16x256xf32>
    %12 = arith.truncf %11 : vector<16x256xf32> to vector<16x256xbf16>
    %c0_7 = arith.constant 0 : index
    %c0_8 = arith.constant 0 : index
    %13 = vector.load %arg5[%c0_7, %c0_8] : memref<256x256xbf16, #tpu.memory_space<vmem>>, vector<256x256xbf16>
    %cst_9 = arith.constant dense<0.000000e+00> : vector<16x256xf32>
    %14 = tpu.matmul %12, %13, %cst_9 {dimension_numbers = #tpu.dot_dimension_numbers<[1], [0], [0], [1], [0, 0, 1, 1], [], []>} : vector<16x256xbf16>, vector<256x256xbf16>, vector<16x256xf32> -> vector<16x256xf32>
    %c0_i32 = arith.constant 0 : i32
    %15 = arith.cmpi eq, %arg1, %c0_i32 : i32
    %16 = arith.extui %15 : i1 to i32
    %c0_i32_10 = arith.constant 0 : i32
    %17 = arith.cmpi ne, %16, %c0_i32_10 : i32
    scf.if %17 {
      %c0_14 = arith.constant 0 : index
      %c0_15 = arith.constant 0 : index
      %24 = vector.load %arg7[%c0_14, %c0_15] : memref<16x256xf32, #tpu.memory_space<vmem>>, vector<16x256xf32>
      tpu.vector_store %arg7[%c0_14, %c0_15], %14 {strides = array<i32>} : memref<16x256xf32, #tpu.memory_space<vmem>>, vector<16x256xf32>,
    } else {
    }
    %c0_i32_11 = arith.constant 0 : i32
    %18 = arith.cmpi sgt, %arg1, %c0_i32_11 : i32
    %19 = arith.extui %18 : i1 to i32
    %c0_i32_12 = arith.constant 0 : i32
    %20 = arith.cmpi ne, %19, %c0_i32_12 : i32
    scf.if %20 {
      %c0_14 = arith.constant 0 : index
      %c0_15 = arith.constant 0 : index
      %24 = vector.load %arg7[%c0_14, %c0_15] : memref<16x256xf32, #tpu.memory_space<vmem>>, vector<16x256xf32>
      %25 = arith.addf %24, %14 : vector<16x256xf32>
      %c0_16 = arith.constant 0 : index
      %c0_17 = arith.constant 0 : index
      %26 = vector.load %arg7[%c0_16, %c0_17] : memref<16x256xf32, #tpu.memory_space<vmem>>, vector<16x256xf32>
      tpu.vector_store %arg7[%c0_16, %c0_17], %25 {strides = array<i32>} : memref<16x256xf32, #tpu.memory_space<vmem>>, vector<16x256xf32>,
    } else {
    }
    %c1_i32 = arith.constant 1 : i32
    %21 = arith.cmpi eq, %arg1, %c1_i32 : i32
    %22 = arith.extui %21 : i1 to i32
    %c0_i32_13 = arith.constant 0 : i32
    %23 = arith.cmpi ne, %22, %c0_i32_13 : i32
    scf.if %23 {
      %c0_14 = arith.constant 0 : index
      %c0_15 = arith.constant 0 : index
      %24 = vector.load %arg7[%c0_14, %c0_15] : memref<16x256xf32, #tpu.memory_space<vmem>>, vector<16x256xf32>
      %c0_16 = arith.constant 0 : index
      %c0_17 = arith.constant 0 : index
      %25 = vector.load %arg6[%c0_16, %c0_17] : memref<16x256xf32, #tpu.memory_space<vmem>>, vector<16x256xf32>
      tpu.vector_store %arg6[%c0_16, %c0_17], %24 {strides = array<i32>} : memref<16x256xf32, #tpu.memory_space<vmem>>, vector<16x256xf32>,
    } else {
    }
    return
  }
  func.func @transform_0(%arg0: i32, %arg1: i32) -> (i32, i32) {
    %c0_i32 = arith.constant 0 : i32
    %c0_i32_0 = arith.constant 0 : i32
    return %arg0, %c0_i32 : i32, i32
  }
  func.func @transform_1(%arg0: i32, %arg1: i32) -> (i32, i32) {
    %c0_i32 = arith.constant 0 : i32
    %c0_i32_0 = arith.constant 0 : i32
    return %c0_i32, %arg1 : i32, i32
  }
  func.func @transform_2(%arg0: i32, %arg1: i32) -> (i32, i32) {
    %c0_i32 = arith.constant 0 : i32
    %c0_i32_0 = arith.constant 0 : i32
    return %c0_i32, %arg1 : i32, i32
  }
  func.func @transform_3(%arg0: i32, %arg1: i32) -> (i32, i32) {
    %c0_i32 = arith.constant 0 : i32
    %c0_i32_0 = arith.constant 0 : i32
    return %arg1, %c0_i32 : i32, i32
  }
  func.func @transform_4(%arg0: i32, %arg1: i32) -> (i32, i32) {
    %c0_i32 = arith.constant 0 : i32
    %c0_i32_0 = arith.constant 0 : i32
    return %arg0, %c0_i32 : i32, i32
  }
}

</mosaic_0001>

<llo_original>
// kernel: tpu_custom_call.1
$region0: #{tpu_custom_call.1}
  #allocation0 [shape = 'u32[]', space=smem, size = 0x4, offset = 0x4, fixed_abs, tag = 'smem constant byte address 0x4 - core index']
  #allocation1 [shape = 'u32[144,128]{1,0:T(1,128)}', space=vmem, size = 0x12000, scoped, tag = 'internal scratch']
  #allocation2 [shape = 'f32[16,256]{1,0:T(8,128)}', space=vmem, size = 0x4000, scoped, tag = 'scratch operand']
  %s0 = inlined_call_operand.hbm [shape: bf16[16,256], index: 0, kind: input, shape index: {}]
  %s1 = inlined_call_operand.hbm [shape: bf16[256,512], index: 1, kind: input, shape index: {}]
  %s2 = inlined_call_operand.hbm [shape: bf16[256,512], index: 2, kind: input, shape index: {}]
  %s3 = inlined_call_operand.hbm [shape: bf16[512,256], index: 3, kind: input, shape index: {}]
  %s4 = inlined_call_operand.hbm [shape: f32[16,256], index: 4, kind: output, shape index: {}]
  %s5 = sld [smem:[#allocation0]]
  $region77: #{tpu_custom_call.1} parent=0
    _
  %s7 = ssub.s32 1, %s5
  %s8 = scalar_select 0, %s7, %s5
  $region1: #{tpu_custom_call.1} parent=0
    #allocation3 [shape = 'u8[8192]{0}', space=vmem, size = 0x2000, scoped, tag = 'input window, operand 0, single buffered']
    #allocation4 [shape = 's32[2]{0}', space=sflag, size = 0x8, scoped, tag = 'scoped memory for tpu_custom_call.1']
    #allocation5 [shape = 's32[2]{0}', space=sflag, size = 0x8, scoped, tag = 'scoped memory for tpu_custom_call.1']
    #allocation6 [shape = 'u8[262144]{0}', space=vmem, size = 0x40000, scoped, tag = 'input window, operand 1']
    #allocation7 [shape = 's32[2]{0}', space=sflag, size = 0x8, scoped, tag = 'scoped memory for tpu_custom_call.1']
    #allocation8 [shape = 'u8[262144]{0}', space=vmem, size = 0x40000, scoped, tag = 'input window, operand 2']
    #allocation9 [shape = 'u8[262144]{0}', space=vmem, size = 0x40000, scoped, tag = 'input window, operand 3']
    #allocation10 [shape = 's32[2]{0}', space=sflag, size = 0x8, scoped, tag = 'scoped memory for tpu_custom_call.1']
    #allocation11 [shape = 'u8[16384]{0}', space=vmem, size = 0x4000, scoped, tag = 'output window, operand 0, single buffered']
    %9 = vsyncpa [#allocation4], 0
    %10 = vsyncpa [#allocation7], 0
    %s11 = scalar_lea.sflag [#allocation7], 1
    %12 = vsyncpa %s11, 0
    %13 = vsyncpa [#allocation10], 0
    %s14 = scalar_lea.sflag [#allocation10], 1
    %15 = vsyncpa %s14, 0
    %16 = vsyncpa [#allocation5], 0
    loop: start=0, step=1, limit=4
    $region2: #{tpu_custom_call.1} parent=1 // loop_pre_header
      _
    $region3: #{tpu_custom_call.1} parent=1 // loop_header
      %s18 = sphi 0, %s22
      %p19 = scmp.ge.s32.totalorder %s18, 4
      %s25 = sphi 0, %s37
      %s26 = sphi 0, %s33
      %s27 = sphi 0, %s25
      %s28 = sphi 0, %s26
      %s29 = sphi 0, %s27
      %s30 = sphi 0, %s28
      %s40 = sphi 0, %s42
      %s43 = sphi 0, %s40
      %s44 = sphi 0, %s43
      %s60 = sphi 0, %s44
      %s66 = sphi 0, %s68
      %s69 = sphi 0, %s66
      %s70 = sphi 0, %s69
      %s86 = sphi 0, %s70
      %s92 = sphi 0, %s94
      %s95 = sphi 0, %s92
      %s96 = sphi 0, %s95
      %s112 = sphi 0, %s96
      %s118 = sphi 0, %s120
      %s121 = sphi 0, %s118
      %s122 = sphi 0, %s121
      %s138 = sphi 0, %s122
      %s144 = sphi 0, %s146
      %s147 = sphi 0, %s144
      %s148 = sphi 0, %s147
      %s164 = sphi 0, %s148
    $region4: #{tpu_custom_call.1} parent=1 // loop_header_branch
      %21 = sbr.rel (%p19) target = $region8
    $region5: #{tpu_custom_call.1} parent=1 // loop_body
      %s23 = ssub.s32 %s18, 1
      %s24 = ssub.s32 %s18, 2
      %s31 = sadd.s32 1, %s26
      %p32 = scmp.ge.s32.totalorder %s31, 2
      %s33 = scalar_select %p32, 0, %s31
      %s34 = sadd.s32 1, %s25
      %s35 = scalar_select %p32, %s34, %s25
      %p36 = scmp.ge.s32.totalorder %s35, 1
      %s37 = scalar_select %p36, 0, %s35
      %s38 = ssub.s32 %s25, %s37
      %p39 = scmp.eq.s32.totalorder %s38, 0
      %s41 = sadd.s32 %s40, 1
      %s42 = scalar_select %p39, %s40, %s41
      %p45 = pneg %p39
      %p46 = scmp.eq.s32.totalorder %s18, 1
      %p47 = por %p45, %p46
      %p48 = scmp.ne.s32.totalorder %s40, %s43
      %p49 = scmp.eq.s32.totalorder %s18, 0
      %p50 = por %p48, %p49
      %p51 = scmp.ne.s32.totalorder %s40, %s43
      %p52 = scmp.eq.s32.totalorder %s23, 1
      %p53 = por %p51, %p52
      %p54 = scmp.ne.s32.totalorder %s43, %s44
      %p55 = scmp.eq.s32.totalorder %s23, 0
      %p56 = por %p54, %p55
      %p57 = scmp.ne.s32.totalorder %s43, %s44
      %p58 = scmp.eq.s32.totalorder %s24, 1
      %p59 = por %p57, %p58
      %p61 = scmp.ne.s32.totalorder %s44, %s60
      %p62 = scmp.eq.s32.totalorder %s24, 0
      %p63 = por %p61, %p62
      %s64 = ssub.s32 %s26, %s33
      %p65 = scmp.eq.s32.totalorder %s64, 0
      %s67 = sadd.s32 %s66, 1
      %s68 = scalar_select %p65, %s66, %s67
      %p71 = pneg %p65
      %p72 = scmp.eq.s32.totalorder %s18, 1
      %p73 = por %p71, %p72
      %p74 = scmp.ne.s32.totalorder %s66, %s69
      %p75 = scmp.eq.s32.totalorder %s18, 0
      %p76 = por %p74, %p75
      %p77 = scmp.ne.s32.totalorder %s66, %s69
      %p78 = scmp.eq.s32.totalorder %s23, 1
      %p79 = por %p77, %p78
      %p80 = scmp.ne.s32.totalorder %s69, %s70
      %p81 = scmp.eq.s32.totalorder %s23, 0
      %p82 = por %p80, %p81
      %p83 = scmp.ne.s32.totalorder %s69, %s70
      %p84 = scmp.eq.s32.totalorder %s24, 1
      %p85 = por %p83, %p84
      %p87 = scmp.ne.s32.totalorder %s70, %s86
      %p88 = scmp.eq.s32.totalorder %s24, 0
      %p89 = por %p87, %p88
      %s90 = ssub.s32 %s26, %s33
      %p91 = scmp.eq.s32.totalorder %s90, 0
      %s93 = sadd.s32 %s92, 1
      %s94 = scalar_select %p91, %s92, %s93
      %p97 = pneg %p91
      %p98 = scmp.eq.s32.totalorder %s18, 1
      %p99 = por %p97, %p98
      %p100 = scmp.ne.s32.totalorder %s92, %s95
      %p101 = scmp.eq.s32.totalorder %s18, 0
      %p102 = por %p100, %p101
      %p103 = scmp.ne.s32.totalorder %s92, %s95
      %p104 = scmp.eq.s32.totalorder %s23, 1
      %p105 = por %p103, %p104
      %p106 = scmp.ne.s32.totalorder %s95, %s96
      %p107 = scmp.eq.s32.totalorder %s23, 0
      %p108 = por %p106, %p107
      %p109 = scmp.ne.s32.totalorder %s95, %s96
      %p110 = scmp.eq.s32.totalorder %s24, 1
      %p111 = por %p109, %p110
      %p113 = scmp.ne.s32.totalorder %s96, %s112
      %p114 = scmp.eq.s32.totalorder %s24, 0
      %p115 = por %p113, %p114
      %s116 = ssub.s32 %s26, %s33
      %p117 = scmp.eq.s32.totalorder %s116, 0
      %s119 = sadd.s32 %s118, 1
      %s120 = scalar_select %p117, %s118, %s119
      %p123 = pneg %p117
      %p124 = scmp.eq.s32.totalorder %s18, 1
      %p125 = por %p123, %p124
      %p126 = scmp.ne.s32.totalorder %s118, %s121
      %p127 = scmp.eq.s32.totalorder %s18, 0
      %p128 = por %p126, %p127
      %p129 = scmp.ne.s32.totalorder %s118, %s121
      %p130 = scmp.eq.s32.totalorder %s23, 1
      %p131 = por %p129, %p130
      %p132 = scmp.ne.s32.totalorder %s121, %s122
      %p133 = scmp.eq.s32.totalorder %s23, 0
      %p134 = por %p132, %p133
      %p135 = scmp.ne.s32.totalorder %s121, %s122
      %p136 = scmp.eq.s32.totalorder %s24, 1
      %p137 = por %p135, %p136
      %p139 = scmp.ne.s32.totalorder %s122, %s138
      %p140 = scmp.eq.s32.totalorder %s24, 0
      %p141 = por %p139, %p140
      %s142 = ssub.s32 %s25, %s37
      %p143 = scmp.eq.s32.totalorder %s142, 0
      %s145 = sadd.s32 %s144, 1
      %s146 = scalar_select %p143, %s144, %s145
      %p149 = pneg %p143
      %p150 = scmp.eq.s32.totalorder %s18, 1
      %p151 = por %p149, %p150
      %p152 = scmp.ne.s32.totalorder %s144, %s147
      %p153 = scmp.eq.s32.totalorder %s18, 0
      %p154 = por %p152, %p153
      %p155 = scmp.ne.s32.totalorder %s144, %s147
      %p156 = scmp.eq.s32.totalorder %s23, 1
      %p157 = por %p155, %p156
      %p158 = scmp.ne.s32.totalorder %s147, %s148
      %p159 = scmp.eq.s32.totalorder %s23, 0
      %p160 = por %p158, %p159
      %p161 = scmp.ne.s32.totalorder %s147, %s148
      %p162 = scmp.eq.s32.totalorder %s24, 1
      %p163 = por %p161, %p162
      %p165 = scmp.ne.s32.totalorder %s148, %s164
      %p166 = scmp.eq.s32.totalorder %s24, 0
      %p167 = por %p165, %p166
      %p168 = scmp.le.s32.totalorder 1, %s18
      %p169 = scmp.lt.s32.totalorder %s18, 3
      %p170 = pnand %p168, %p169
      %p171 = pneg %p170
      // Predicated region
      $region9: #{tpu_custom_call.1} parent=5 // pred_check
        _
      $region10: #{tpu_custom_call.1} parent=5 // pred_check_branch
        %173 = sbr.rel (%p170) target = $region12
      $region11: #{tpu_custom_call.1} parent=5 // pred_region
        %s174 = ssub.s32 %s18, 1
        // Predicated region
        $region13: #{tpu_custom_call.1} parent=11 // pred_check
          %p175 = pneg %p56
        $region14: #{tpu_custom_call.1} parent=11 // pred_check_branch
          %177 = sbr.rel (%p175) target = $region16
        $region15: #{tpu_custom_call.1} parent=11 // pred_region
          %s178 = smul.u32 2, %s27
          %s180 = ssub.s32 256, 256
          %181 = vsyncadd [#allocation4], %s180
          %s182 = smul.addr %s178, 2
          %s183 = smul.addr %s182, 64
          %s184 = scalar_lea.hbm %s0, %s183
          %s185 = sshll.u32 [#allocation3], 4
          %s186 = int_to_ptr.vmem [resolvable:$true] %s185
          %191 = dma.hbm_to_vmem [thread:$0]  %s184, 256, %s186, [#allocation4], 128, 128, 8
        $region16: #{tpu_custom_call.1} parent=11 // pred_fallthru
          _
      $region12: #{tpu_custom_call.1} parent=5 // pred_fallthru
        _
      %p192 = scmp.lt.s32.totalorder %s18, 2
      // Predicated region
      $region17: #{tpu_custom_call.1} parent=5 // pred_check
        %p193 = pneg %p192
      $region18: #{tpu_custom_call.1} parent=5 // pred_check_branch
        %195 = sbr.rel (%p193) target = $region20
      $region19: #{tpu_custom_call.1} parent=5 // pred_region
        // Predicated region
        $region21: #{tpu_custom_call.1} parent=19 // pred_check
          %p196 = pneg %p76
        $region22: #{tpu_custom_call.1} parent=19 // pred_check_branch
          %198 = sbr.rel (%p196) target = $region24
        $region23: #{tpu_custom_call.1} parent=19 // pred_region
          %s199 = sand.u32 %s18, 1
          %s200 = scalar_lea.sflag [#allocation7], %s199
          %s201 = sand.u32 %s66, 1
          %s202 = smul.addr %s201, 256
          %s203 = scalar_lea.vmem [#allocation6], %s202
          %s204 = smul.u32 2, %s26
          %s206 = ssub.s32 4096, 4096
          %207 = vsyncadd %s200, %s206
          %s208 = smul.addr %s204, 64
          %s209 = scalar_lea.hbm %s1, %s208
          %s210 = sshll.u32 %s203, 4
          %s211 = int_to_ptr.vmem [resolvable:$true] %s210
          %216 = dma.hbm_to_vmem [thread:$0]  %s209, 4096, %s211, %s200, 256, 128, 8
        $region24: #{tpu_custom_call.1} parent=19 // pred_fallthru
          _
        // Predicated region
        $region25: #{tpu_custom_call.1} parent=19 // pred_check
          %p217 = pneg %p102
        $region26: #{tpu_custom_call.1} parent=19 // pred_check_branch
          %219 = sbr.rel (%p217) target = $region28
        $region27: #{tpu_custom_call.1} parent=19 // pred_region
          %s220 = sand.u32 %s18, 1
          %s221 = scalar_lea.sflag [#allocation7], %s220
          %s222 = sand.u32 %s92, 1
          %s223 = smul.addr %s222, 256
          %s224 = scalar_lea.vmem [#allocation8], %s223
          %s225 = smul.u32 2, %s26
          %s227 = ssub.s32 4096, 4096
          %228 = vsyncadd %s221, %s227
          %s229 = smul.addr %s225, 64
          %s230 = scalar_lea.hbm %s2, %s229
          %s231 = sshll.u32 %s224, 4
          %s232 = int_to_ptr.vmem [resolvable:$true] %s231
          %237 = dma.hbm_to_vmem [thread:$0]  %s230, 4096, %s232, %s221, 256, 128, 8
        $region28: #{tpu_custom_call.1} parent=19 // pred_fallthru
          _
        // Predicated region
        $region29: #{tpu_custom_call.1} parent=19 // pred_check
          %p238 = pneg %p128
        $region30: #{tpu_custom_call.1} parent=19 // pred_check_branch
          %240 = sbr.rel (%p238) target = $region32
        $region31: #{tpu_custom_call.1} parent=19 // pred_region
          %s241 = sand.u32 %s118, 1
          %s242 = scalar_lea.sflag [#allocation10], %s241
          %s243 = sand.u32 %s118, 1
          %s244 = smul.addr %s243, 256
          %s245 = scalar_lea.vmem [#allocation9], %s244
          %s246 = smul.u32 32, %s26
          %s248 = ssub.s32 4096, 4096
          %249 = vsyncadd %s242, %s248
          %s250 = smul.addr %s246, 2
          %s251 = smul.addr %s250, 64
          %s252 = scalar_lea.hbm %s3, %s251
          %s253 = sshll.u32 %s245, 4
          %s254 = int_to_ptr.vmem [resolvable:$true] %s253
          %259 = dma.hbm_to_vmem [thread:$0]  %s252, 4096, %s254, %s242, 128, 128, 8
        $region32: #{tpu_custom_call.1} parent=19 // pred_fallthru
          _
      $region20: #{tpu_custom_call.1} parent=5 // pred_fallthru
        _
      %p260 = scmp.le.s32.totalorder 1, %s18
      %p261 = scmp.lt.s32.totalorder %s18, 3
      %p262 = pnand %p260, %p261
      %p263 = pneg %p262
      // Predicated region
      $region33: #{tpu_custom_call.1} parent=5 // pred_check
        _
      $region34: #{tpu_custom_call.1} parent=5 // pred_check_branch
        %265 = sbr.rel (%p262) target = $region36
      $region35: #{tpu_custom_call.1} parent=5 // pred_region
        %s266 = ssub.s32 %s18, 1
        // Predicated region
        $region37: #{tpu_custom_call.1} parent=35 // pred_check
          %p267 = pneg %p56
        $region38: #{tpu_custom_call.1} parent=35 // pred_check_branch
          %269 = sbr.rel (%p267) target = $region40
        $region39: #{tpu_custom_call.1} parent=35 // pred_region
          %270 = dma.done [#allocation4], 256
        $region40: #{tpu_custom_call.1} parent=35 // pred_fallthru
          _
        %s271 = sand.u32 %s23, 1
        %s272 = scalar_lea.sflag [#allocation7], %s271
        %s273 = sand.u32 %s69, 1
        %s274 = smul.addr %s273, 256
        %s275 = scalar_lea.vmem [#allocation6], %s274
        // Predicated region
        $region41: #{tpu_custom_call.1} parent=35 // pred_check
          %p276 = pneg %p82
        $region42: #{tpu_custom_call.1} parent=35 // pred_check_branch
          %278 = sbr.rel (%p276) target = $region44
        $region43: #{tpu_custom_call.1} parent=35 // pred_region
          %279 = dma.done %s272, 4096
        $region44: #{tpu_custom_call.1} parent=35 // pred_fallthru
          _
        %s280 = sand.u32 %s23, 1
        %s281 = scalar_lea.sflag [#allocation7], %s280
        %s282 = sand.u32 %s95, 1
        %s283 = smul.addr %s282, 256
        %s284 = scalar_lea.vmem [#allocation8], %s283
        // Predicated region
        $region45: #{tpu_custom_call.1} parent=35 // pred_check
          %p285 = pneg %p108
        $region46: #{tpu_custom_call.1} parent=35 // pred_check_branch
          %287 = sbr.rel (%p285) target = $region48
        $region47: #{tpu_custom_call.1} parent=35 // pred_region
          %288 = dma.done %s281, 4096
        $region48: #{tpu_custom_call.1} parent=35 // pred_fallthru
          _
        %s289 = sand.u32 %s121, 1
        %s290 = scalar_lea.sflag [#allocation10], %s289
        %s291 = sand.u32 %s121, 1
        %s292 = smul.addr %s291, 256
        %s293 = scalar_lea.vmem [#allocation9], %s292
        // Predicated region
        $region49: #{tpu_custom_call.1} parent=35 // pred_check
          %p294 = pneg %p134
        $region50: #{tpu_custom_call.1} parent=35 // pred_check_branch
          %296 = sbr.rel (%p294) target = $region52
        $region51: #{tpu_custom_call.1} parent=35 // pred_region
          %297 = dma.done %s290, 4096
        $region52: #{tpu_custom_call.1} parent=35 // pred_fallthru
          _
        %p298 = pneg %p56
        %p299 = pneg %p53
        %s300 = sand.u32 %s23, 1
        %s301 = scalar_lea.sflag [#allocation7], %s300
        %s302 = sand.u32 %s69, 1
        %s303 = smul.addr %s302, 256
        %s304 = scalar_lea.vmem [#allocation6], %s303
        %p305 = pneg %p82
        %p306 = pneg %p79
        %s307 = sand.u32 %s23, 1
        %s308 = scalar_lea.sflag [#allocation7], %s307
        %s309 = sand.u32 %s95, 1
        %s310 = smul.addr %s309, 256
        %s311 = scalar_lea.vmem [#allocation8], %s310
        %p312 = pneg %p108
        %p313 = pneg %p105
        %s314 = sand.u32 %s121, 1
        %s315 = scalar_lea.sflag [#allocation10], %s314
        %s316 = sand.u32 %s121, 1
        %s317 = smul.addr %s316, 256
        %s318 = scalar_lea.vmem [#allocation9], %s317
        %p319 = pneg %p134
        %p320 = pneg %p131
        %p321 = pneg %p160
        %p322 = pneg %p157
        %s323 = smul.u32 2, %s27
        %s324 = smul.u32 2, %s28
        %s325 = smul.u32 2, %s28
        %s326 = smul.u32 32, %s28
        %s327 = smul.u32 2, %s27
        %v328 = vld [vmem:[#allocation3] sm:$0xff]
        %v329 = vld [vmem:[#allocation3 + $0x8] sm:$0xff]
        %v330 = vld [vmem:[%s275] sm:$0xff]
        %v331 = vld [vmem:[%s275 + $0x8] sm:$0xff]
        %v332 = vld [vmem:[%s275 + $0x10] sm:$0xff]
        %v333 = vld [vmem:[%s275 + $0x18] sm:$0xff]
        %v334 = vld [vmem:[%s275 + $0x20] sm:$0xff]
        %v335 = vld [vmem:[%s275 + $0x28] sm:$0xff]
        %v336 = vld [vmem:[%s275 + $0x30] sm:$0xff]
        %v337 = vld [vmem:[%s275 + $0x38] sm:$0xff]
        %v338 = vld [vmem:[%s275 + $0x40] sm:$0xff]
        %v339 = vld [vmem:[%s275 + $0x48] sm:$0xff]
        %v340 = vld [vmem:[%s275 + $0x50] sm:$0xff]
        %v341 = vld [vmem:[%s275 + $0x58] sm:$0xff]
        %v342 = vld [vmem:[%s275 + $0x60] sm:$0xff]
        %v343 = vld [vmem:[%s275 + $0x68] sm:$0xff]
        %v344 = vld [vmem:[%s275 + $0x70] sm:$0xff]
        %v345 = vld [vmem:[%s275 + $0x78] sm:$0xff]
        %v346 = vld [vmem:[%s275 + $0x80] sm:$0xff]
        %v347 = vld [vmem:[%s275 + $0x88] sm:$0xff]
        %v348 = vld [vmem:[%s275 + $0x90] sm:$0xff]
        %v349 = vld [vmem:[%s275 + $0x98] sm:$0xff]
        %v350 = vld [vmem:[%s275 + $0xa0] sm:$0xff]
        %v351 = vld [vmem:[%s275 + $0xa8] sm:$0xff]
        %v352 = vld [vmem:[%s275 + $0xb0] sm:$0xff]
        %v353 = vld [vmem:[%s275 + $0xb8] sm:$0xff]
        %v354 = vld [vmem:[%s275 + $0xc0] sm:$0xff]
        %v355 = vld [vmem:[%s275 + $0xc8] sm:$0xff]
        %v356 = vld [vmem:[%s275 + $0xd0] sm:$0xff]
        %v357 = vld [vmem:[%s275 + $0xd8] sm:$0xff]
        %v358 = vld [vmem:[%s275 + $0xe0] sm:$0xff]
        %v359 = vld [vmem:[%s275 + $0xe8] sm:$0xff]
        %v360 = vld [vmem:[%s275 + $0xf0] sm:$0xff]
        %v361 = vld [vmem:[%s275 + $0xf8] sm:$0xff]
        %v364 = vunpack.c.l.b16 %v328
        %v365 = vunpack.c.h.b16 %v328
        %v366 = vunpack.c.l.b16 %v329
        %v367 = vunpack.c.h.b16 %v329
        %v368 = vpack.c.b16 %v366, %v364
        %v369 = vpack.c.b16 %v367, %v365
        %v404 = vunpack.c.l.b16 %v330
        %v405 = vunpack.c.h.b16 %v330
        %v406 = vunpack.c.l.b16 %v331
        %v407 = vunpack.c.h.b16 %v331
        %v408 = vunpack.c.l.b16 %v332
        %v409 = vunpack.c.h.b16 %v332
        %v410 = vunpack.c.l.b16 %v333
        %v411 = vunpack.c.h.b16 %v333
        %v412 = vunpack.c.l.b16 %v334
        %v413 = vunpack.c.h.b16 %v334
        %v414 = vunpack.c.l.b16 %v335
        %v415 = vunpack.c.h.b16 %v335
        %v416 = vunpack.c.l.b16 %v336
        %v417 = vunpack.c.h.b16 %v336
        %v418 = vunpack.c.l.b16 %v337
        %v419 = vunpack.c.h.b16 %v337
        %v420 = vunpack.c.l.b16 %v338
        %v421 = vunpack.c.h.b16 %v338
        %v422 = vunpack.c.l.b16 %v339
        %v423 = vunpack.c.h.b16 %v339
        %v424 = vunpack.c.l.b16 %v340
        %v425 = vunpack.c.h.b16 %v340
        %v426 = vunpack.c.l.b16 %v341
        %v427 = vunpack.c.h.b16 %v341
        %v428 = vunpack.c.l.b16 %v342
        %v429 = vunpack.c.h.b16 %v342
        %v430 = vunpack.c.l.b16 %v343
        %v431 = vunpack.c.h.b16 %v343
        %v432 = vunpack.c.l.b16 %v344
        %v433 = vunpack.c.h.b16 %v344
        %v434 = vunpack.c.l.b16 %v345
        %v435 = vunpack.c.h.b16 %v345
        %v436 = vunpack.c.l.b16 %v346
        %v437 = vunpack.c.h.b16 %v346
        %v438 = vunpack.c.l.b16 %v347
        %v439 = vunpack.c.h.b16 %v347
        %v440 = vunpack.c.l.b16 %v348
        %v441 = vunpack.c.h.b16 %v348
        %v442 = vunpack.c.l.b16 %v349
        %v443 = vunpack.c.h.b16 %v349
        %v444 = vunpack.c.l.b16 %v350
        %v445 = vunpack.c.h.b16 %v350
        %v446 = vunpack.c.l.b16 %v351
        %v447 = vunpack.c.h.b16 %v351
        %v448 = vunpack.c.l.b16 %v352
        %v449 = vunpack.c.h.b16 %v352
        %v450 = vunpack.c.l.b16 %v353
        %v451 = vunpack.c.h.b16 %v353
        %v452 = vunpack.c.l.b16 %v354
        %v453 = vunpack.c.h.b16 %v354
        %v454 = vunpack.c.l.b16 %v355
        %v455 = vunpack.c.h.b16 %v355
        %v456 = vunpack.c.l.b16 %v356
        %v457 = vunpack.c.h.b16 %v356
        %v458 = vunpack.c.l.b16 %v357
        %v459 = vunpack.c.h.b16 %v357
        %v460 = vunpack.c.l.b16 %v358
        %v461 = vunpack.c.h.b16 %v358
        %v462 = vunpack.c.l.b16 %v359
        %v463 = vunpack.c.h.b16 %v359
        %v464 = vunpack.c.l.b16 %v360
        %v465 = vunpack.c.h.b16 %v360
        %v466 = vunpack.c.l.b16 %v361
        %v467 = vunpack.c.h.b16 %v361
        %v468 = vpack.c.b16 %v406, %v404
        %v469 = vpack.c.b16 %v407, %v405
        %v470 = vpack.c.b16 %v410, %v408
        %v471 = vpack.c.b16 %v411, %v409
        %v472 = vpack.c.b16 %v414, %v412
        %v473 = vpack.c.b16 %v415, %v413
        %v474 = vpack.c.b16 %v418, %v416
        %v475 = vpack.c.b16 %v419, %v417
        %v476 = vpack.c.b16 %v422, %v420
        %v477 = vpack.c.b16 %v423, %v421
        %v478 = vpack.c.b16 %v426, %v424
        %v479 = vpack.c.b16 %v427, %v425
        %v480 = vpack.c.b16 %v430, %v428
        %v481 = vpack.c.b16 %v431, %v429
        %v482 = vpack.c.b16 %v434, %v432
        %v483 = vpack.c.b16 %v435, %v433
        %v484 = vpack.c.b16 %v438, %v436
        %v485 = vpack.c.b16 %v439, %v437
        %v486 = vpack.c.b16 %v442, %v440
        %v487 = vpack.c.b16 %v443, %v441
        %v488 = vpack.c.b16 %v446, %v444
        %v489 = vpack.c.b16 %v447, %v445
        %v490 = vpack.c.b16 %v450, %v448
        %v491 = vpack.c.b16 %v451, %v449
        %v492 = vpack.c.b16 %v454, %v452
        %v493 = vpack.c.b16 %v455, %v453
        %v494 = vpack.c.b16 %v458, %v456
        %v495 = vpack.c.b16 %v459, %v457
        %v496 = vpack.c.b16 %v462, %v460
        %v497 = vpack.c.b16 %v463, %v461
        %v498 = vpack.c.b16 %v466, %v464
        %v499 = vpack.c.b16 %v467, %v465
        %532 = vmatprep.subr.bf16.mxu0 %v469
        %533 = vmatpush1.bf16.msra.mxu0 %v468
        %534 = vmatprep.subr.bf16.mxu0 %v471
        %535 = vmatpush1.bf16.msra.mxu0 %v470
        %536 = vmatprep.subr.bf16.mxu0 %v473
        %537 = vmatpush1.bf16.msra.mxu0 %v472
        %538 = vmatprep.subr.bf16.mxu0 %v475
        %539 = vmatpush1.bf16.msra.mxu0 %v474
        %540 = vmatprep.subr.bf16.mxu0 %v477
        %541 = vmatpush1.bf16.msra.mxu0 %v476
        %542 = vmatprep.subr.bf16.mxu0 %v479
        %543 = vmatpush1.bf16.msra.mxu0 %v478
        %544 = vmatprep.subr.bf16.mxu0 %v481
        %545 = vmatpush1.bf16.msra.mxu0 %v480
        %546 = vmatprep.subr.bf16.mxu0 %v483
        %547 = vmatpush1.bf16.msra.mxu0 %v482
        %548 = vmatprep.subr.bf16.mxu0 %v485
        %549 = vmatpush1.bf16.msra.mxu0 %v484
        %550 = vmatprep.subr.bf16.mxu0 %v487
        %551 = vmatpush1.bf16.msra.mxu0 %v486
        %552 = vmatprep.subr.bf16.mxu0 %v489
        %553 = vmatpush1.bf16.msra.mxu0 %v488
        %554 = vmatprep.subr.bf16.mxu0 %v491
        %555 = vmatpush1.bf16.msra.mxu0 %v490
        %556 = vmatprep.subr.bf16.mxu0 %v493
        %557 = vmatpush1.bf16.msra.mxu0 %v492
        %558 = vmatprep.subr.bf16.mxu0 %v495
        %559 = vmatpush1.bf16.msra.mxu0 %v494
        %560 = vmatprep.subr.bf16.mxu0 %v497
        %561 = vmatpush1.bf16.msra.mxu0 %v496
        %562 = vmatprep.subr.bf16.mxu0 %v499
        %563 = vmatpush1.bf16.msra.mxu0 %v498
        %564 = vmatprep.mubr.bf16.mxu0 %v369
        %565 = vmatmul.mubr.bf16.gmra.mrb[0].mxu0 %v368
        %v566 = vpop.f32.mrb[0].mxu0
        %v567 = vadd.f32 0.0, %v566
        %v568 = vpop.f32.mrb[0].mxu0
        %v569 = vadd.f32 0.0, %v568
        %v570 = vpop.f32.mrb[0].mxu0
        %v571 = vadd.f32 0.0, %v570
        %v572 = vpop.f32.mrb[0].mxu0
        %v573 = vadd.f32 0.0, %v572
        %574 = vdwg.mxu0
        %v575 = vld [vmem:[%s284] sm:$0xff]
        %v576 = vld [vmem:[%s284 + $0x8] sm:$0xff]
        %v577 = vld [vmem:[%s284 + $0x10] sm:$0xff]
        %v578 = vld [vmem:[%s284 + $0x18] sm:$0xff]
        %v579 = vld [vmem:[%s284 + $0x20] sm:$0xff]
        %v580 = vld [vmem:[%s284 + $0x28] sm:$0xff]
        %v581 = vld [vmem:[%s284 + $0x30] sm:$0xff]
        %v582 = vld [vmem:[%s284 + $0x38] sm:$0xff]
        %v583 = vld [vmem:[%s284 + $0x40] sm:$0xff]
        %v584 = vld [vmem:[%s284 + $0x48] sm:$0xff]
        %v585 = vld [vmem:[%s284 + $0x50] sm:$0xff]
        %v586 = vld [vmem:[%s284 + $0x58] sm:$0xff]
        %v587 = vld [vmem:[%s284 + $0x60] sm:$0xff]
        %v588 = vld [vmem:[%s284 + $0x68] sm:$0xff]
        %v589 = vld [vmem:[%s284 + $0x70] sm:$0xff]
        %v590 = vld [vmem:[%s284 + $0x78] sm:$0xff]
        %v591 = vld [vmem:[%s284 + $0x80] sm:$0xff]
        %v592 = vld [vmem:[%s284 + $0x88] sm:$0xff]
        %v593 = vld [vmem:[%s284 + $0x90] sm:$0xff]
        %v594 = vld [vmem:[%s284 + $0x98] sm:$0xff]
        %v595 = vld [vmem:[%s284 + $0xa0] sm:$0xff]
        %v596 = vld [vmem:[%s284 + $0xa8] sm:$0xff]
        %v597 = vld [vmem:[%s284 + $0xb0] sm:$0xff]
        %v598 = vld [vmem:[%s284 + $0xb8] sm:$0xff]
        %v599 = vld [vmem:[%s284 + $0xc0] sm:$0xff]
        %v600 = vld [vmem:[%s284 + $0xc8] sm:$0xff]
        %v601 = vld [vmem:[%s284 + $0xd0] sm:$0xff]
        %v602 = vld [vmem:[%s284 + $0xd8] sm:$0xff]
        %v603 = vld [vmem:[%s284 + $0xe0] sm:$0xff]
        %v604 = vld [vmem:[%s284 + $0xe8] sm:$0xff]
        %v605 = vld [vmem:[%s284 + $0xf0] sm:$0xff]
        %v606 = vld [vmem:[%s284 + $0xf8] sm:$0xff]
        %v639 = vunpack.c.l.b16 %v575
        %v640 = vunpack.c.h.b16 %v575
        %v641 = vunpack.c.l.b16 %v576
        %v642 = vunpack.c.h.b16 %v576
        %v643 = vunpack.c.l.b16 %v577
        %v644 = vunpack.c.h.b16 %v577
        %v645 = vunpack.c.l.b16 %v578
        %v646 = vunpack.c.h.b16 %v578
        %v647 = vunpack.c.l.b16 %v579
        %v648 = vunpack.c.h.b16 %v579
        %v649 = vunpack.c.l.b16 %v580
        %v650 = vunpack.c.h.b16 %v580
        %v651 = vunpack.c.l.b16 %v581
        %v652 = vunpack.c.h.b16 %v581
        %v653 = vunpack.c.l.b16 %v582
        %v654 = vunpack.c.h.b16 %v582
        %v655 = vunpack.c.l.b16 %v583
        %v656 = vunpack.c.h.b16 %v583
        %v657 = vunpack.c.l.b16 %v584
        %v658 = vunpack.c.h.b16 %v584
        %v659 = vunpack.c.l.b16 %v585
        %v660 = vunpack.c.h.b16 %v585
        %v661 = vunpack.c.l.b16 %v586
        %v662 = vunpack.c.h.b16 %v586
        %v663 = vunpack.c.l.b16 %v587
        %v664 = vunpack.c.h.b16 %v587
        %v665 = vunpack.c.l.b16 %v588
        %v666 = vunpack.c.h.b16 %v588
        %v667 = vunpack.c.l.b16 %v589
        %v668 = vunpack.c.h.b16 %v589
        %v669 = vunpack.c.l.b16 %v590
        %v670 = vunpack.c.h.b16 %v590
        %v671 = vunpack.c.l.b16 %v591
        %v672 = vunpack.c.h.b16 %v591
        %v673 = vunpack.c.l.b16 %v592
        %v674 = vunpack.c.h.b16 %v592
        %v675 = vunpack.c.l.b16 %v593
        %v676 = vunpack.c.h.b16 %v593
        %v677 = vunpack.c.l.b16 %v594
        %v678 = vunpack.c.h.b16 %v594
        %v679 = vunpack.c.l.b16 %v595
        %v680 = vunpack.c.h.b16 %v595
        %v681 = vunpack.c.l.b16 %v596
        %v682 = vunpack.c.h.b16 %v596
        %v683 = vunpack.c.l.b16 %v597
        %v684 = vunpack.c.h.b16 %v597
        %v685 = vunpack.c.l.b16 %v598
        %v686 = vunpack.c.h.b16 %v598
        %v687 = vunpack.c.l.b16 %v599
        %v688 = vunpack.c.h.b16 %v599
        %v689 = vunpack.c.l.b16 %v600
        %v690 = vunpack.c.h.b16 %v600
        %v691 = vunpack.c.l.b16 %v601
        %v692 = vunpack.c.h.b16 %v601
        %v693 = vunpack.c.l.b16 %v602
        %v694 = vunpack.c.h.b16 %v602
        %v695 = vunpack.c.l.b16 %v603
        %v696 = vunpack.c.h.b16 %v603
        %v697 = vunpack.c.l.b16 %v604
        %v698 = vunpack.c.h.b16 %v604
        %v699 = vunpack.c.l.b16 %v605
        %v700 = vunpack.c.h.b16 %v605
        %v701 = vunpack.c.l.b16 %v606
        %v702 = vunpack.c.h.b16 %v606
        %v703 = vpack.c.b16 %v641, %v639
        %v704 = vpack.c.b16 %v642, %v640
        %v705 = vpack.c.b16 %v645, %v643
        %v706 = vpack.c.b16 %v646, %v644
        %v707 = vpack.c.b16 %v649, %v647
        %v708 = vpack.c.b16 %v650, %v648
        %v709 = vpack.c.b16 %v653, %v651
        %v710 = vpack.c.b16 %v654, %v652
        %v711 = vpack.c.b16 %v657, %v655
        %v712 = vpack.c.b16 %v658, %v656
        %v713 = vpack.c.b16 %v661, %v659
        %v714 = vpack.c.b16 %v662, %v660
        %v715 = vpack.c.b16 %v665, %v663
        %v716 = vpack.c.b16 %v666, %v664
        %v717 = vpack.c.b16 %v669, %v667
        %v718 = vpack.c.b16 %v670, %v668
        %v719 = vpack.c.b16 %v673, %v671
        %v720 = vpack.c.b16 %v674, %v672
        %v721 = vpack.c.b16 %v677, %v675
        %v722 = vpack.c.b16 %v678, %v676
        %v723 = vpack.c.b16 %v681, %v679
        %v724 = vpack.c.b16 %v682, %v680
        %v725 = vpack.c.b16 %v685, %v683
        %v726 = vpack.c.b16 %v686, %v684
        %v727 = vpack.c.b16 %v689, %v687
        %v728 = vpack.c.b16 %v690, %v688
        %v729 = vpack.c.b16 %v693, %v691
        %v730 = vpack.c.b16 %v694, %v692
        %v731 = vpack.c.b16 %v697, %v695
        %v732 = vpack.c.b16 %v698, %v696
        %v733 = vpack.c.b16 %v701, %v699
        %v734 = vpack.c.b16 %v702, %v700
        %767 = vmatprep.subr.bf16.mxu0 %v704
        %768 = vmatpush1.bf16.msra.mxu0 %v703
        %769 = vmatprep.subr.bf16.mxu0 %v706
        %770 = vmatpush1.bf16.msra.mxu0 %v705
        %771 = vmatprep.subr.bf16.mxu0 %v708
        %772 = vmatpush1.bf16.msra.mxu0 %v707
        %773 = vmatprep.subr.bf16.mxu0 %v710
        %774 = vmatpush1.bf16.msra.mxu0 %v709
        %775 = vmatprep.subr.bf16.mxu0 %v712
        %776 = vmatpush1.bf16.msra.mxu0 %v711
        %777 = vmatprep.subr.bf16.mxu0 %v714
        %778 = vmatpush1.bf16.msra.mxu0 %v713
        %779 = vmatprep.subr.bf16.mxu0 %v716
        %780 = vmatpush1.bf16.msra.mxu0 %v715
        %781 = vmatprep.subr.bf16.mxu0 %v718
        %782 = vmatpush1.bf16.msra.mxu0 %v717
        %783 = vmatprep.subr.bf16.mxu0 %v720
        %784 = vmatpush1.bf16.msra.mxu0 %v719
        %785 = vmatprep.subr.bf16.mxu0 %v722
        %786 = vmatpush1.bf16.msra.mxu0 %v721
        %787 = vmatprep.subr.bf16.mxu0 %v724
        %788 = vmatpush1.bf16.msra.mxu0 %v723
        %789 = vmatprep.subr.bf16.mxu0 %v726
        %790 = vmatpush1.bf16.msra.mxu0 %v725
        %791 = vmatprep.subr.bf16.mxu0 %v728
        %792 = vmatpush1.bf16.msra.mxu0 %v727
        %793 = vmatprep.subr.bf16.mxu0 %v730
        %794 = vmatpush1.bf16.msra.mxu0 %v729
        %795 = vmatprep.subr.bf16.mxu0 %v732
        %796 = vmatpush1.bf16.msra.mxu0 %v731
        %797 = vmatprep.subr.bf16.mxu0 %v734
        %798 = vmatpush1.bf16.msra.mxu0 %v733
        %799 = vmatprep.mubr.bf16.mxu0 %v369
        %800 = vmatmul.mubr.bf16.gmra.mrb[0].mxu0 %v368
        %v801 = vpop.f32.mrb[0].mxu0
        %v802 = vadd.f32 0.0, %v801
        %v803 = vpop.f32.mrb[0].mxu0
        %v804 = vadd.f32 0.0, %v803
        %v805 = vpop.f32.mrb[0].mxu0
        %v806 = vadd.f32 0.0, %v805
        %v807 = vpop.f32.mrb[0].mxu0
        %v808 = vadd.f32 0.0, %v807
        %809 = vdwg.mxu0
        %v810 = vxor.u32 %v567, 2147483648
        %v811 = vxor.u32 %v569, 2147483648
        %v812 = vxor.u32 %v571, 2147483648
        %v813 = vxor.u32 %v573, 2147483648
        %v814 = vmul.f32 %v810, 1.442695
        %v815 = vpow.pop %v814
        %v816 = vmul.f32 %v811, 1.442695
        %v817 = vpow.pop %v816
        %v818 = vmul.f32 %v812, 1.442695
        %v819 = vpow.pop %v818
        %v820 = vmul.f32 %v813, 1.442695
        %v821 = vpow.pop %v820
        %v822 = vadd.f32 %v815, 1.0
        %v823 = vadd.f32 %v817, 1.0
        %v824 = vadd.f32 %v819, 1.0
        %v825 = vadd.f32 %v821, 1.0
        %v826 = vrcp.pop %v822
        %v827 = vmul.f32 1.0, %v826
        %v828 = vrcp.pop %v823
        %v829 = vmul.f32 1.0, %v828
        %v830 = vrcp.pop %v824
        %v831 = vmul.f32 1.0, %v830
        %v832 = vrcp.pop %v825
        %v833 = vmul.f32 1.0, %v832
        %v834 = vmul.f32 %v567, %v827
        %v835 = vmul.f32 %v569, %v829
        %v836 = vmul.f32 %v571, %v831
        %v837 = vmul.f32 %v573, %v833
        %v838 = vmul.f32 %v834, %v802
        %v839 = vmul.f32 %v835, %v804
        %v840 = vmul.f32 %v836, %v806
        %v841 = vmul.f32 %v837, %v808
        %v842 = vpack.c.bf16 %v840, %v838
        %v843 = vpack.c.bf16 %v841, %v839
        %v844 = vld [vmem:[%s293] sm:$0xff]
        %v845 = vld [vmem:[%s293 + $0x8] sm:$0xff]
        %v846 = vld [vmem:[%s293 + $0x10] sm:$0xff]
        %v847 = vld [vmem:[%s293 + $0x18] sm:$0xff]
        %v848 = vld [vmem:[%s293 + $0x20] sm:$0xff]
        %v849 = vld [vmem:[%s293 + $0x28] sm:$0xff]
        %v850 = vld [vmem:[%s293 + $0x30] sm:$0xff]
        %v851 = vld [vmem:[%s293 + $0x38] sm:$0xff]
        %v852 = vld [vmem:[%s293 + $0x40] sm:$0xff]
        %v853 = vld [vmem:[%s293 + $0x48] sm:$0xff]
        %v854 = vld [vmem:[%s293 + $0x50] sm:$0xff]
        %v855 = vld [vmem:[%s293 + $0x58] sm:$0xff]
        %v856 = vld [vmem:[%s293 + $0x60] sm:$0xff]
        %v857 = vld [vmem:[%s293 + $0x68] sm:$0xff]
        %v858 = vld [vmem:[%s293 + $0x70] sm:$0xff]
        %v859 = vld [vmem:[%s293 + $0x78] sm:$0xff]
        %v860 = vld [vmem:[%s293 + $0x80] sm:$0xff]
        %v861 = vld [vmem:[%s293 + $0x88] sm:$0xff]
        %v862 = vld [vmem:[%s293 + $0x90] sm:$0xff]
        %v863 = vld [vmem:[%s293 + $0x98] sm:$0xff]
        %v864 = vld [vmem:[%s293 + $0xa0] sm:$0xff]
        %v865 = vld [vmem:[%s293 + $0xa8] sm:$0xff]
        %v866 = vld [vmem:[%s293 + $0xb0] sm:$0xff]
        %v867 = vld [vmem:[%s293 + $0xb8] sm:$0xff]
        %v868 = vld [vmem:[%s293 + $0xc0] sm:$0xff]
        %v869 = vld [vmem:[%s293 + $0xc8] sm:$0xff]
        %v870 = vld [vmem:[%s293 + $0xd0] sm:$0xff]
        %v871 = vld [vmem:[%s293 + $0xd8] sm:$0xff]
        %v872 = vld [vmem:[%s293 + $0xe0] sm:$0xff]
        %v873 = vld [vmem:[%s293 + $0xe8] sm:$0xff]
        %v874 = vld [vmem:[%s293 + $0xf0] sm:$0xff]
        %v875 = vld [vmem:[%s293 + $0xf8] sm:$0xff]
        %v908 = vunpack.c.l.b16 %v844
        %v909 = vunpack.c.h.b16 %v844
        %v910 = vunpack.c.l.b16 %v845
        %v911 = vunpack.c.h.b16 %v845
        %v912 = vunpack.c.l.b16 %v846
        %v913 = vunpack.c.h.b16 %v846
        %v914 = vunpack.c.l.b16 %v847
        %v915 = vunpack.c.h.b16 %v847
        %v916 = vunpack.c.l.b16 %v848
        %v917 = vunpack.c.h.b16 %v848
        %v918 = vunpack.c.l.b16 %v849
        %v919 = vunpack.c.h.b16 %v849
        %v920 = vunpack.c.l.b16 %v850
        %v921 = vunpack.c.h.b16 %v850
        %v922 = vunpack.c.l.b16 %v851
        %v923 = vunpack.c.h.b16 %v851
        %v924 = vunpack.c.l.b16 %v852
        %v925 = vunpack.c.h.b16 %v852
        %v926 = vunpack.c.l.b16 %v853
        %v927 = vunpack.c.h.b16 %v853
        %v928 = vunpack.c.l.b16 %v854
        %v929 = vunpack.c.h.b16 %v854
        %v930 = vunpack.c.l.b16 %v855
        %v931 = vunpack.c.h.b16 %v855
        %v932 = vunpack.c.l.b16 %v856
        %v933 = vunpack.c.h.b16 %v856
        %v934 = vunpack.c.l.b16 %v857
        %v935 = vunpack.c.h.b16 %v857
        %v936 = vunpack.c.l.b16 %v858
        %v937 = vunpack.c.h.b16 %v858
        %v938 = vunpack.c.l.b16 %v859
        %v939 = vunpack.c.h.b16 %v859
        %v940 = vunpack.c.l.b16 %v860
        %v941 = vunpack.c.h.b16 %v860
        %v942 = vunpack.c.l.b16 %v861
        %v943 = vunpack.c.h.b16 %v861
        %v944 = vunpack.c.l.b16 %v862
        %v945 = vunpack.c.h.b16 %v862
        %v946 = vunpack.c.l.b16 %v863
        %v947 = vunpack.c.h.b16 %v863
        %v948 = vunpack.c.l.b16 %v864
        %v949 = vunpack.c.h.b16 %v864
        %v950 = vunpack.c.l.b16 %v865
        %v951 = vunpack.c.h.b16 %v865
        %v952 = vunpack.c.l.b16 %v866
        %v953 = vunpack.c.h.b16 %v866
        %v954 = vunpack.c.l.b16 %v867
        %v955 = vunpack.c.h.b16 %v867
        %v956 = vunpack.c.l.b16 %v868
        %v957 = vunpack.c.h.b16 %v868
        %v958 = vunpack.c.l.b16 %v869
        %v959 = vunpack.c.h.b16 %v869
        %v960 = vunpack.c.l.b16 %v870
        %v961 = vunpack.c.h.b16 %v870
        %v962 = vunpack.c.l.b16 %v871
        %v963 = vunpack.c.h.b16 %v871
        %v964 = vunpack.c.l.b16 %v872
        %v965 = vunpack.c.h.b16 %v872
        %v966 = vunpack.c.l.b16 %v873
        %v967 = vunpack.c.h.b16 %v873
        %v968 = vunpack.c.l.b16 %v874
        %v969 = vunpack.c.h.b16 %v874
        %v970 = vunpack.c.l.b16 %v875
        %v971 = vunpack.c.h.b16 %v875
        %v972 = vpack.c.b16 %v910, %v908
        %v973 = vpack.c.b16 %v911, %v909
        %v974 = vpack.c.b16 %v914, %v912
        %v975 = vpack.c.b16 %v915, %v913
        %v976 = vpack.c.b16 %v918, %v916
        %v977 = vpack.c.b16 %v919, %v917
        %v978 = vpack.c.b16 %v922, %v920
        %v979 = vpack.c.b16 %v923, %v921
        %v980 = vpack.c.b16 %v926, %v924
        %v981 = vpack.c.b16 %v927, %v925
        %v982 = vpack.c.b16 %v930, %v928
        %v983 = vpack.c.b16 %v931, %v929
        %v984 = vpack.c.b16 %v934, %v932
        %v985 = vpack.c.b16 %v935, %v933
        %v986 = vpack.c.b16 %v938, %v936
        %v987 = vpack.c.b16 %v939, %v937
        %v988 = vpack.c.b16 %v942, %v940
        %v989 = vpack.c.b16 %v943, %v941
        %v990 = vpack.c.b16 %v946, %v944
        %v991 = vpack.c.b16 %v947, %v945
        %v992 = vpack.c.b16 %v950, %v948
        %v993 = vpack.c.b16 %v951, %v949
        %v994 = vpack.c.b16 %v954, %v952
        %v995 = vpack.c.b16 %v955, %v953
        %v996 = vpack.c.b16 %v958, %v956
        %v997 = vpack.c.b16 %v959, %v957
        %v998 = vpack.c.b16 %v962, %v960
        %v999 = vpack.c.b16 %v963, %v961
        %v1000 = vpack.c.b16 %v966, %v964
        %v1001 = vpack.c.b16 %v967, %v965
        %v1002 = vpack.c.b16 %v970, %v968
        %v1003 = vpack.c.b16 %v971, %v969
        %1036 = vmatprep.subr.bf16.mxu0 %v973
        %1037 = vmatpush1.bf16.msra.mxu0 %v972
        %1038 = vmatprep.subr.bf16.mxu0 %v975
        %1039 = vmatpush1.bf16.msra.mxu0 %v974
        %1040 = vmatprep.subr.bf16.mxu0 %v977
        %1041 = vmatpush1.bf16.msra.mxu0 %v976
        %1042 = vmatprep.subr.bf16.mxu0 %v979
        %1043 = vmatpush1.bf16.msra.mxu0 %v978
        %1044 = vmatprep.subr.bf16.mxu0 %v981
        %1045 = vmatpush1.bf16.msra.mxu0 %v980
        %1046 = vmatprep.subr.bf16.mxu0 %v983
        %1047 = vmatpush1.bf16.msra.mxu0 %v982
        %1048 = vmatprep.subr.bf16.mxu0 %v985
        %1049 = vmatpush1.bf16.msra.mxu0 %v984
        %1050 = vmatprep.subr.bf16.mxu0 %v987
        %1051 = vmatpush1.bf16.msra.mxu0 %v986
        %1052 = vmatprep.subr.bf16.mxu0 %v989
        %1053 = vmatpush1.bf16.msra.mxu0 %v988
        %1054 = vmatprep.subr.bf16.mxu0 %v991
        %1055 = vmatpush1.bf16.msra.mxu0 %v990
        %1056 = vmatprep.subr.bf16.mxu0 %v993
        %1057 = vmatpush1.bf16.msra.mxu0 %v992
        %1058 = vmatprep.subr.bf16.mxu0 %v995
        %1059 = vmatpush1.bf16.msra.mxu0 %v994
        %1060 = vmatprep.subr.bf16.mxu0 %v997
        %1061 = vmatpush1.bf16.msra.mxu0 %v996
        %1062 = vmatprep.subr.bf16.mxu0 %v999
        %1063 = vmatpush1.bf16.msra.mxu0 %v998
        %1064 = vmatprep.subr.bf16.mxu0 %v1001
        %1065 = vmatpush1.bf16.msra.mxu0 %v1000
        %1066 = vmatprep.subr.bf16.mxu0 %v1003
        %1067 = vmatpush1.bf16.msra.mxu0 %v1002
        %1068 = vmatprep.mubr.bf16.mxu0 %v843
        %1069 = vmatmul.mubr.bf16.gmra.mrb[0].mxu0 %v842
        %v1070 = vpop.f32.mrb[0].mxu0
        %v1071 = vadd.f32 0.0, %v1070
        %v1072 = vpop.f32.mrb[0].mxu0
        %v1073 = vadd.f32 0.0, %v1072
        %v1074 = vpop.f32.mrb[0].mxu0
        %v1075 = vadd.f32 0.0, %v1074
        %v1076 = vpop.f32.mrb[0].mxu0
        %v1077 = vadd.f32 0.0, %v1076
        %1078 = vdwg.mxu0
        %p1079 = scmp.eq.s32.totalorder %s28, 0
        // Predicated region
        $region53: #{tpu_custom_call.1} parent=35 // pred_check
          %p1080 = pneg %p1079
        $region54: #{tpu_custom_call.1} parent=35 // pred_check_branch
          %1082 = sbr.rel (%p1080) target = $region56
        $region55: #{tpu_custom_call.1} parent=35 // pred_region
          %1083 = vst [vmem:[#allocation2] sm:$0xff] %v1071
          %1084 = vst [vmem:[#allocation2 + $0x8] sm:$0xff] %v1073
          %1085 = vst [vmem:[#allocation2 + $0x10] sm:$0xff] %v1075
          %1086 = vst [vmem:[#allocation2 + $0x18] sm:$0xff] %v1077
        $region56: #{tpu_custom_call.1} parent=35 // pred_fallthru
          _
        %p1087 = scmp.gt.s32.totalorder %s28, 0
        // Predicated region
        $region57: #{tpu_custom_call.1} parent=35 // pred_check
          %p1088 = pneg %p1087
        $region58: #{tpu_custom_call.1} parent=35 // pred_check_branch
          %1090 = sbr.rel (%p1088) target = $region60
        $region59: #{tpu_custom_call.1} parent=35 // pred_region
          %v1091 = vld [vmem:[#allocation2] sm:$0xff]
          %v1092 = vld [vmem:[#allocation2 + $0x8] sm:$0xff]
          %v1093 = vld [vmem:[#allocation2 + $0x10] sm:$0xff]
          %v1094 = vld [vmem:[#allocation2 + $0x18] sm:$0xff]
          %v1095 = vadd.f32 %v1091, %v1071
          %v1096 = vadd.f32 %v1092, %v1073
          %v1097 = vadd.f32 %v1093, %v1075
          %v1098 = vadd.f32 %v1094, %v1077
          %1099 = vst [vmem:[#allocation2] sm:$0xff] %v1095
          %1100 = vst [vmem:[#allocation2 + $0x8] sm:$0xff] %v1096
          %1101 = vst [vmem:[#allocation2 + $0x10] sm:$0xff] %v1097
          %1102 = vst [vmem:[#allocation2 + $0x18] sm:$0xff] %v1098
        $region60: #{tpu_custom_call.1} parent=35 // pred_fallthru
          _
        %p1103 = scmp.eq.s32.totalorder %s28, 1
        // Predicated region
        $region61: #{tpu_custom_call.1} parent=35 // pred_check
          %p1104 = pneg %p1103
        $region62: #{tpu_custom_call.1} parent=35 // pred_check_branch
          %1106 = sbr.rel (%p1104) target = $region64
        $region63: #{tpu_custom_call.1} parent=35 // pred_region
          %v1107 = vld [vmem:[#allocation2] sm:$0xff]
          %v1108 = vld [vmem:[#allocation2 + $0x8] sm:$0xff]
          %v1109 = vld [vmem:[#allocation2 + $0x10] sm:$0xff]
          %v1110 = vld [vmem:[#allocation2 + $0x18] sm:$0xff]
          %1111 = vst [vmem:[#allocation11] sm:$0xff] %v1107
          %1112 = vst [vmem:[#allocation11 + $0x8] sm:$0xff] %v1108
          %1113 = vst [vmem:[#allocation11 + $0x10] sm:$0xff] %v1109
          %1114 = vst [vmem:[#allocation11 + $0x18] sm:$0xff] %v1110
        $region64: #{tpu_custom_call.1} parent=35 // pred_fallthru
          _
        // Predicated region
        $region65: #{tpu_custom_call.1} parent=35 // pred_check
          %p1115 = pneg %p157
        $region66: #{tpu_custom_call.1} parent=35 // pred_check_branch
          %1117 = sbr.rel (%p1115) target = $region68
        $region67: #{tpu_custom_call.1} parent=35 // pred_region
          %s1118 = smul.u32 2, %s27
          %s1120 = ssub.s32 512, 512
          %1121 = vsyncadd [#allocation5], %s1120
          %s1122 = smul.addr %s1118, 2
          %s1123 = smul.addr %s1122, 128
          %s1124 = scalar_lea.hbm %s4, %s1123
          %s1125 = sshll.u32 [#allocation11], 4
          %s1126 = int_to_ptr.vmem [resolvable:$true] %s1125
          %1131 = dma.vmem_to_hbm [thread:$0]  %s1126, 512, %s1124, [#allocation5], 256, 256, 16
        $region68: #{tpu_custom_call.1} parent=35 // pred_fallthru
          _
        // Predicated region
        $region69: #{tpu_custom_call.1} parent=35 // pred_check
          %p1132 = pneg %p157
        $region70: #{tpu_custom_call.1} parent=35 // pred_check_branch
          %1134 = sbr.rel (%p1132) target = $region72
        $region71: #{tpu_custom_call.1} parent=35 // pred_region
          %1135 = dma.done [#allocation5], 512
        $region72: #{tpu_custom_call.1} parent=35 // pred_fallthru
          _
      $region36: #{tpu_custom_call.1} parent=5 // pred_fallthru
        _
      %p1136 = scmp.le.s32.totalorder 2, %s18
      // Predicated region
      $region73: #{tpu_custom_call.1} parent=5 // pred_check
        %p1137 = pneg %p1136
      $region74: #{tpu_custom_call.1} parent=5 // pred_check_branch
        %1139 = sbr.rel (%p1137) target = $region76
      $region75: #{tpu_custom_call.1} parent=5 // pred_region
        %s1140 = ssub.s32 %s18, 2
      $region76: #{tpu_custom_call.1} parent=5 // pred_fallthru
        _
    $region6: #{tpu_custom_call.1} parent=1 // loop_footer
      %s22 = sadd.s32 1, %s18
    $region7: #{tpu_custom_call.1} parent=1 // loop_footer_branch
      %17 = sbr.rel target = $region3
    $region8: #{tpu_custom_call.1} parent=1 // loop_exit
      _
    %1141 = vsyncpa [#allocation4], 1
    %s1142 = scalar_lea.sflag [#allocation4], 1
    %1143 = vsyncpa %s1142, 1
    %1144 = vsyncpa [#allocation7], 1
    %s1145 = scalar_lea.sflag [#allocation7], 1
    %1146 = vsyncpa %s1145, 1
    %1147 = vsyncpa [#allocation10], 1
    %s1148 = scalar_lea.sflag [#allocation10], 1
    %1149 = vsyncpa %s1148, 1
    %1150 = vsyncpa [#allocation5], 1
    %s1151 = scalar_lea.sflag [#allocation5], 1
    %1152 = vsyncpa %s1151, 1

</llo_original>
